<compile_context>
chip_gen: v7x
topology: tpu7x:2x2x1
jax: 0.10.0
libtpu: 0.0.40
codegen_flags: <defaults>
</compile_context>

<pallas_src>
import numpy as np
import jax
import jax.numpy as jnp
from jax import lax
from jax.experimental import pallas as pl
from jax.experimental.pallas import tpu as pltpu


def _round_up(x, m):
    return (x + m - 1) // m * m


# ----------------------------- Pallas kernel ------------------------------- #
def _rocket_kernel(p_ref, w_ref, b_ref, negmask_ref, mask_ref, invlen_ref, out_ref):
    # p_ref:       (BB, T_pad, CK_pad)   patches (bf16 or f32)
    # w_ref:       (CK_pad, TILE_N)      flattened shifted dense conv weights
    # b_ref:       (1, TILE_N)           per-kernel bias (f32)
    # negmask_ref: (T_pad, TILE_N)       0 where t < L_out, -1e30 elsewhere (f32)
    # mask_ref:    (T_pad, TILE_N)       1 where t < L_out, 0 elsewhere (f32)
    # invlen_ref:  (1, TILE_N)           1 / L_out (f32)
    # out_ref:     (BB, 2, TILE_N)       [:,0,:]=max  [:,1,:]=ppv (f32)
    bb, tp, ck = p_ref.shape
    tn = w_ref.shape[1]

    p = p_ref[...].reshape(bb * tp, ck)                              # fold B into M
    acc = jnp.dot(p, w_ref[...], preferred_element_type=jnp.float32)  # (BB*T, TN) f32
    out = acc.reshape(bb, tp, tn) + b_ref[...][None]                  # (BB, T, TN)

    negmask = negmask_ref[...][None]                                  # (1, T, TN)
    mask = mask_ref[...][None]                                        # (1, T, TN)

    m = jnp.max(out + negmask, axis=1)                                # (BB, TN)
    cnt = jnp.sum(jnp.where(out > 0.0, mask, 0.0), axis=1)            # (BB, TN)
    ppv = cnt * invlen_ref[...]                                       # (BB, TN)

    out_ref[:, 0:1, :] = m[:, None, :]
    out_ref[:, 1:2, :] = ppv[:, None, :]


# ------------------------- parameter construction -------------------------- #
def init_rocket_params(c_in, seq_len, n_kernels, kss, seed=0):
    """Deterministically mimic ROCKET.__init__ parameter generation."""
    rng = np.random.RandomState(seed)
    kss = [ks for ks in kss if ks < seq_len]
    kernels = []
    for _ in range(n_kernels):
        ks = int(rng.choice(kss))
        dilation = 2 ** rng.uniform(0, np.log2((seq_len - 1) // (ks - 1)))
        padding = int((ks - 1) * dilation // 2) if rng.randint(2) == 1 else 0
        weight = rng.randn(1, c_in, ks).astype(np.float32)
        weight -= weight.mean()
        bias = (2.0 * (rng.rand(1) - 0.5)).astype(np.float32)
        kernels.append(dict(
            ks=ks,
            dilation=int(dilation),        # Conv1d dilation = int(dilation)
            pad=2 * padding,               # Conv1d padding  = 2 * padding
            weight=weight,
            bias=bias,
        ))
    return kernels


def build_dense_params(kernels, c_in, seq_len):
    """Rewrite every (ks, dilation, padding) conv as one shifted dense filter."""
    n = len(kernels)
    pads = [k["pad"] for k in kernels]
    kdense = [k["dilation"] * (k["ks"] - 1) + 1 for k in kernels]
    louts = [seq_len + 2 * p - kd + 1 for p, kd in zip(pads, kdense)]
    pmax = max(pads)
    offs = [pmax - p for p in pads]
    kk = max(o + kd for o, kd in zip(offs, kdense))
    t = max(louts)

    w_dense = np.zeros((n, c_in, kk), np.float32)
    bias = np.zeros((n,), np.float32)
    for i, k in enumerate(kernels):
        d = k["dilation"]
        for j in range(k["ks"]):
            w_dense[i, :, offs[i] + j * d] = k["weight"][0, :, j]
        bias[i] = k["bias"][0]
    return w_dense, bias, np.array(louts, np.float32), pmax, kk, t


def _build_patches(x, pmax, kk, t):
    """im2col glue (plain JAX): (B,C,L) -> (B, T, C*KK), channel-major."""
    b, c, l = x.shape
    lp = max(l + 2 * pmax, t + kk - 1)
    x_pad = jnp.zeros((b, c, lp), jnp.float32).at[:, :, pmax:pmax + l].set(x)
    idx = jnp.arange(t)[:, None] + jnp.arange(kk)[None, :]
    patches = x_pad[:, :, idx]                                    # (B, C, T, KK)
    return jnp.transpose(patches, (0, 2, 1, 3)).reshape(b, t, c * kk)


# ------------------------------ forward pass -------------------------------- #
def rocket_forward(x, w_dense, bias, louts, pmax, kk, t,
                   compute_dtype=jnp.bfloat16, tile_n=512):
    """ROCKET forward: (B, C, L) -> (B, 2*n_kernels) interleaved [max_k, ppv_k].

    tile_n: lane-aligned N tile. ~512 fits comfortably on v7x (64 MiB VMEM);
    1024-2048 is reasonable on v5e/v6e with a raised vmem limit.
    """
    b, c, l = x.shape
    n = w_dense.shape[0]
    ck = c * kk

    # ---- padded / tiled shapes ------------------------------------------- #
    t_pad = _round_up(t, 8)
    ck_pad = _round_up(ck, 128)
    n_pad = _round_up(n, 128)
    tile_n = max(128, (min(tile_n, n_pad) // 128) * 128)
    n_pad = _round_up(n_pad, tile_n)
    bb = min(b, max(1, 256 // t_pad))          # batch fold: M = bb * t_pad
    b_pad = _round_up(b, bb)

    # ---- im2col patches (bf16 to halve HBM traffic) ----------------------- #
    patches = _build_patches(x, pmax, kk, t).astype(compute_dtype)
    patches_full = jnp.zeros((b_pad, t_pad, ck_pad), compute_dtype)
    patches_full = patches_full.at[:b, :t, :ck].set(patches)

    # ---- constant operands (precomputed, hoisted out of the kernel) ------- #
    w_flat = np.zeros((ck_pad, n_pad), np.float32)
    w_flat[:ck, :n] = w_dense.reshape(n, ck).T
    bias_full = np.zeros((1, n_pad), np.float32)
    bias_full[0, :n] = bias
    lens_full = np.ones((n_pad,), np.float32)           # padded cols: len=1
    lens_full[:n] = louts
    inv_lens = (1.0 / lens_full).reshape(1, n_pad)
    t_idx = np.arange(t_pad, dtype=np.float32)[:, None]
    mask01 = np.zeros((t_pad, n_pad), np.float32)
    mask01[:, :n] = (t_idx < louts[None, :]).astype(np.float32)
    negmask = (mask01 - 1.0) * 1e30                      # 0 valid / -1e30 invalid

    grid = (n_pad // tile_n, b_pad // bb)                # N outer, B inner

    out = pl.pallas_call(
        _rocket_kernel,
        out_shape=jax.ShapeDtypeStruct((b_pad, 2, n_pad), jnp.float32),
        grid_spec=pltpu.PrefetchScalarGridSpec(
            num_scalar_prefetch=0,
            grid=grid,
            in_specs=[
                pl.BlockSpec((bb, t_pad, ck_pad), lambda j, i: (i, 0, 0)),  # patches
                pl.BlockSpec((ck_pad, tile_n), lambda j, i: (0, j)),        # W
                pl.BlockSpec((1, tile_n), lambda j, i: (0, j)),             # bias
                pl.BlockSpec((t_pad, tile_n), lambda j, i: (0, j)),         # negmask
                pl.BlockSpec((t_pad, tile_n), lambda j, i: (0, j)),         # mask01
                pl.BlockSpec((1, tile_n), lambda j, i: (0, j)),             # 1/len
            ],
            out_specs=pl.BlockSpec((bb, 2, tile_n), lambda j, i: (i, 0, j)),
        ),
        compiler_params=pltpu.CompilerParams(
            dimension_semantics=("parallel", "parallel"),
            vmem_limit_bytes=48 * 1024 * 1024,
        ),
    )(patches_full,
      jnp.asarray(w_flat, compute_dtype),
      jnp.asarray(bias_full),
      jnp.asarray(negmask),
      jnp.asarray(mask01),
      jnp.asarray(inv_lens))

    max_o = out[:b, 0, :n]
    ppv_o = out[:b, 1, :n]
    # interleave [max_0, ppv_0, max_1, ppv_1, ...] like torch.cat(_output, dim=1)
    return jnp.stack([max_o, ppv_o], axis=-1).reshape(b, 2 * n)


# --------------------------- pure-JAX references ---------------------------- #
def rocket_reference(x, kernels):
    """Exact f32 reference using dilated convs (mirrors the PyTorch module)."""
    outs = []
    for k in kernels:
        w = jnp.asarray(k["weight"])              # (1, C, ks)
        o = lax.conv_general_dilated(
            x, w, window_strides=(1,),
            padding=[(k["pad"], k["pad"])],
            rhs_dilation=(k["dilation"],),
            dimension_numbers=("NCH", "OIH", "NCH"),
        ) + k["bias"][0]
        o = o[:, 0, :]                            # (B, L_out)
        outs.append(jnp.max(o, axis=-1))
        outs.append(jnp.sum(o > 0, axis=-1).astype(jnp.float32) / o.shape[-1])
    return jnp.stack(outs, axis=1)


def rocket_dense_reference(x, w_dense, bias, louts, pmax, kk, t,
                           compute_dtype=jnp.float32):
    """Plain-jnp mirror of the dense-matmul math (same operand dtype as kernel)."""
    b, c, _ = x.shape
    n = w_dense.shape[0]
    ck = c * kk
    patches = _build_patches(x, pmax, kk, t).astype(compute_dtype)       # (B,T,CK)
    w_flat = jnp.asarray(w_dense.reshape(n, ck).T).astype(compute_dtype)  # (CK,N)
    out = jnp.dot(patches, w_flat, preferred_element_type=jnp.float32)
    out = out + jnp.asarray(bias)[None, None, :]                          # (B,T,N)
    t_idx = jnp.arange(t, dtype=jnp.float32)[None, :, None]
    lens = jnp.asarray(louts)[None, None, :]
    valid = t_idx < lens
    m = jnp.max(jnp.where(valid, out, -jnp.inf), axis=1)
    cnt = jnp.sum(jnp.where(valid & (out > 0.0), 1.0, 0.0), axis=1)
    ppv = cnt / jnp.asarray(louts)[None, :]
    return jnp.stack([m, ppv], axis=-1).reshape(b, 2 * n)


# ----------------------------------- main ----------------------------------- #
if __name__ == "__main__":
    c_in, seq_len, n_kernels = 4, 16, 8
    kss = [3, 5, 7]

    kernels = init_rocket_params(c_in, seq_len, n_kernels, kss, seed=0)
    w_dense, bias, louts, pmax, kk, t = build_dense_params(kernels, c_in, seq_len)

    key = jax.random.PRNGKey(0)
    x = jax.random.normal(key, (2, c_in, seq_len), dtype=jnp.float32)

    ref = jax.block_until_ready(rocket_reference(x, kernels))

    # 1) exact-precision path: strict check against the conv reference
    out_f32 = jax.block_until_ready(
        rocket_forward(x, w_dense, bias, louts, pmax, kk, t,
                       compute_dtype=jnp.float32))
    np.testing.assert_allclose(np.asarray(out_f32), np.asarray(ref),
                               rtol=1e-4, atol=1e-4)
    assert out_f32.shape == (2, 2 * n_kernels)

    # 2) production bf16-matmul path: compare against a jnp reference that uses
    #    the same bf16 operands (PPV thresholding near 0 is otherwise sensitive
    #    to the operand dtype, as noted in the review).
    out_bf16 = jax.block_until_ready(
        rocket_forward(x, w_dense, bias, louts, pmax, kk, t,
                       compute_dtype=jnp.bfloat16))
    ref_bf16 = jax.block_until_ready(
        rocket_dense_reference(x, w_dense, bias, louts, pmax, kk, t,
                               compute_dtype=jnp.bfloat16))
    np.testing.assert_allclose(np.asarray(out_bf16), np.asarray(ref_bf16),
                               rtol=1e-2, atol=1e-2)
    assert out_bf16.shape == (2, 2 * n_kernels)

    print("KERNEL_OK")
</pallas_src>

<mosaic_0001>
module attributes {stable_mosaic.version = 11 : i64} {
  func.func @_rocket_kernel(%arg0: i32, %arg1: i32, %arg2: memref<2x32x128xf32, #tpu.memory_space<vmem>>, %arg3: memref<128x128xf32, #tpu.memory_space<vmem>>, %arg4: memref<1x128xf32, #tpu.memory_space<vmem>>, %arg5: memref<32x128xf32, #tpu.memory_space<vmem>>, %arg6: memref<32x128xf32, #tpu.memory_space<vmem>>, %arg7: memref<1x128xf32, #tpu.memory_space<vmem>>, %arg8: memref<2x2x128xf32, #tpu.memory_space<vmem>>) attributes {dimension_semantics = [#tpu.dimension_semantics<parallel>, #tpu.dimension_semantics<parallel>], iteration_bounds = array<i64: 1, 1>, scalar_prefetch = 0 : i64, scratch_operands = 0 : i64, tpu.core_type = #tpu.core_type<tc>, window_params = [{transform_indices = @transform_0, window_bounds = array<i64: 2, 32, 128>}, {transform_indices = @transform_1, window_bounds = array<i64: 128, 128>}, {transform_indices = @transform_2, window_bounds = array<i64: 1, 128>}, {transform_indices = @transform_3, window_bounds = array<i64: 32, 128>}, {transform_indices = @transform_4, window_bounds = array<i64: 32, 128>}, {transform_indices = @transform_5, window_bounds = array<i64: 1, 128>}, {transform_indices = @transform_6, window_bounds = array<i64: 2, 2, 128>}]} {
    %c0 = arith.constant 0 : index
    %c0_0 = arith.constant 0 : index
    %c0_1 = arith.constant 0 : index
    %0 = vector.load %arg2[%c0, %c0_0, %c0_1] : memref<2x32x128xf32, #tpu.memory_space<vmem>>, vector<2x32x128xf32>
    %1 = vector.shape_cast %0 : vector<2x32x128xf32> to vector<64x128xf32>
    %c0_2 = arith.constant 0 : index
    %c0_3 = arith.constant 0 : index
    %2 = vector.load %arg3[%c0_2, %c0_3] : memref<128x128xf32, #tpu.memory_space<vmem>>, vector<128x128xf32>
    %cst = arith.constant dense<0.000000e+00> : vector<64x128xf32>
    %3 = tpu.matmul %1, %2, %cst {dimension_numbers = #tpu.dot_dimension_numbers<[1], [0], [0], [1], [0, 0, 1, 1], [], []>} : vector<64x128xf32>, vector<128x128xf32>, vector<64x128xf32> -> vector<64x128xf32>
    %4 = vector.shape_cast %3 : vector<64x128xf32> to vector<2x32x128xf32>
    %c0_4 = arith.constant 0 : index
    %c0_5 = arith.constant 0 : index
    %5 = vector.load %arg4[%c0_4, %c0_5] : memref<1x128xf32, #tpu.memory_space<vmem>>, vector<1x128xf32>
    %6 = vector.shape_cast %5 : vector<1x128xf32> to vector<1x1x128xf32>
    %7 = vector.broadcast %6 : vector<1x1x128xf32> to vector<2x32x128xf32>
    %8 = arith.addf %4, %7 : vector<2x32x128xf32>
    %c0_6 = arith.constant 0 : index
    %c0_7 = arith.constant 0 : index
    %9 = vector.load %arg5[%c0_6, %c0_7] : memref<32x128xf32, #tpu.memory_space<vmem>>, vector<32x128xf32>
    %10 = vector.shape_cast %9 : vector<32x128xf32> to vector<1x32x128xf32>
    %c0_8 = arith.constant 0 : index
    %c0_9 = arith.constant 0 : index
    %11 = vector.load %arg6[%c0_8, %c0_9] : memref<32x128xf32, #tpu.memory_space<vmem>>, vector<32x128xf32>
    %12 = vector.shape_cast %11 : vector<32x128xf32> to vector<1x32x128xf32>
    %13 = vector.broadcast %10 : vector<1x32x128xf32> to vector<2x32x128xf32>
    %14 = arith.addf %8, %13 : vector<2x32x128xf32>
    %cst_10 = arith.constant dense<0xFF800000> : vector<2x128xf32>
    %15 = vector.multi_reduction <maximumf>, %14, %cst_10 [1] : vector<2x32x128xf32> to vector<2x128xf32>
    %cst_11 = arith.constant 0.000000e+00 : f32
    %16 = vector.broadcast %cst_11 : f32 to vector<2x32x128xf32>
    %17 = arith.cmpf ogt, %8, %16 : vector<2x32x128xf32>
    %cst_12 = arith.constant 0.000000e+00 : f32
    %18 = vector.shape_cast %12 : vector<1x32x128xf32> to vector<1x32x128xf32>
    %19 = vector.broadcast %18 : vector<1x32x128xf32> to vector<2x32x128xf32>
    %20 = vector.broadcast %cst_12 : f32 to vector<2x32x128xf32>
    %21 = arith.select %17, %19, %20 : vector<2x32x128xi1>, vector<2x32x128xf32>
    %cst_13 = arith.constant dense<0.000000e+00> : vector<2x128xf32>
    %22 = vector.multi_reduction <add>, %21, %cst_13 [1] : vector<2x32x128xf32> to vector<2x128xf32>
    %c0_14 = arith.constant 0 : index
    %c0_15 = arith.constant 0 : index
    %23 = vector.load %arg7[%c0_14, %c0_15] : memref<1x128xf32, #tpu.memory_space<vmem>>, vector<1x128xf32>
    %24 = vector.broadcast %23 : vector<1x128xf32> to vector<2x128xf32>
    %25 = arith.mulf %22, %24 : vector<2x128xf32>
    %26 = vector.shape_cast %15 : vector<2x128xf32> to vector<2x1x128xf32>
    %c0_16 = arith.constant 0 : index
    %c0_17 = arith.constant 0 : index
    %c0_18 = arith.constant 0 : index
    %27 = vector.load %arg8[%c0_16, %c0_17, %c0_18] : memref<2x2x128xf32, #tpu.memory_space<vmem>>, vector<2x1x128xf32>
    tpu.vector_store %arg8[%c0_16, %c0_17, %c0_18], %26 {strides = array<i32>} : memref<2x2x128xf32, #tpu.memory_space<vmem>>, vector<2x1x128xf32>,
    %28 = vector.shape_cast %25 : vector<2x128xf32> to vector<2x1x128xf32>
    %c0_19 = arith.constant 0 : index
    %c1 = arith.constant 1 : index
    %c0_20 = arith.constant 0 : index
    %29 = vector.load %arg8[%c0_19, %c1, %c0_20] : memref<2x2x128xf32, #tpu.memory_space<vmem>>, vector<2x1x128xf32>
    tpu.vector_store %arg8[%c0_19, %c1, %c0_20], %28 {strides = array<i32>} : memref<2x2x128xf32, #tpu.memory_space<vmem>>, vector<2x1x128xf32>,
    return
  }
  func.func @transform_0(%arg0: i32, %arg1: i32) -> (i32, i32, i32) {
    %c0_i32 = arith.constant 0 : i32
    %c0_i32_0 = arith.constant 0 : i32
    %c0_i32_1 = arith.constant 0 : i32
    return %arg1, %c0_i32, %c0_i32_0 : i32, i32, i32
  }
  func.func @transform_1(%arg0: i32, %arg1: i32) -> (i32, i32) {
    %c0_i32 = arith.constant 0 : i32
    %c0_i32_0 = arith.constant 0 : i32
    return %c0_i32, %arg0 : i32, i32
  }
  func.func @transform_2(%arg0: i32, %arg1: i32) -> (i32, i32) {
    %c0_i32 = arith.constant 0 : i32
    %c0_i32_0 = arith.constant 0 : i32
    return %c0_i32, %arg0 : i32, i32
  }
  func.func @transform_3(%arg0: i32, %arg1: i32) -> (i32, i32) {
    %c0_i32 = arith.constant 0 : i32
    %c0_i32_0 = arith.constant 0 : i32
    return %c0_i32, %arg0 : i32, i32
  }
  func.func @transform_4(%arg0: i32, %arg1: i32) -> (i32, i32) {
    %c0_i32 = arith.constant 0 : i32
    %c0_i32_0 = arith.constant 0 : i32
    return %c0_i32, %arg0 : i32, i32
  }
  func.func @transform_5(%arg0: i32, %arg1: i32) -> (i32, i32) {
    %c0_i32 = arith.constant 0 : i32
    %c0_i32_0 = arith.constant 0 : i32
    return %c0_i32, %arg0 : i32, i32
  }
  func.func @transform_6(%arg0: i32, %arg1: i32) -> (i32, i32, i32) {
    %c0_i32 = arith.constant 0 : i32
    %c0_i32_0 = arith.constant 0 : i32
    return %arg1, %c0_i32, %arg0 : i32, i32, i32
  }
}

</mosaic_0001>

<llo_original>
// kernel: tpu_custom_call.1
$region0: #{tpu_custom_call.1}
  #allocation0 [shape = 'u32[]', space=smem, size = 0x4, offset = 0x4, fixed_abs, tag = 'smem constant byte address 0x4 - core index']
  #allocation1 [shape = 'u32[144,128]{1,0:T(1,128)}', space=vmem, size = 0x12000, scoped, tag = 'internal scratch']
  %s0 = inlined_call_operand.hbm [shape: f32[2,32,128], index: 0, kind: input, shape index: {}]
  %s1 = inlined_call_operand.hbm [shape: f32[128,128], index: 1, kind: input, shape index: {}]
  %s2 = inlined_call_operand.vmem [shape: f32[1,128], index: 2, kind: input, shape index: {}]
  %s3 = inlined_call_operand.hbm [shape: f32[32,128], index: 3, kind: input, shape index: {}]
  %s4 = inlined_call_operand.hbm [shape: f32[32,128], index: 4, kind: input, shape index: {}]
  %s5 = inlined_call_operand.vmem [shape: f32[1,128], index: 5, kind: input, shape index: {}]
  %s6 = inlined_call_operand.hbm [shape: f32[2,2,128], index: 6, kind: output, shape index: {}]
  %s7 = sld [smem:[#allocation0]]
  $region50: #{tpu_custom_call.1} parent=0
    _
  %s9 = ssub.s32 1, %s7
  %s10 = scalar_select 0, %s9, %s7
  $region1: #{tpu_custom_call.1} parent=0
    #allocation2 [shape = 'u8[32768]{0}', space=vmem, size = 0x8000, scoped, tag = 'input window, operand 0, single buffered']
    #allocation3 [shape = 's32[1]{0}', space=sflag, size = 0x4, scoped, tag = 'scoped memory for tpu_custom_call.1']
    #allocation4 [shape = 's32[1]{0}', space=sflag, size = 0x4, scoped, tag = 'scoped memory for tpu_custom_call.1']
    #allocation5 [shape = 'u8[65536]{0}', space=vmem, size = 0x10000, scoped, tag = 'input window, operand 1, single buffered']
    #allocation6 [shape = 's32[1]{0}', space=sflag, size = 0x4, scoped, tag = 'scoped memory for tpu_custom_call.1']
    #allocation7 [shape = 'u8[16384]{0}', space=vmem, size = 0x4000, scoped, tag = 'input window, operand 3, single buffered']
    #allocation8 [shape = 'u8[16384]{0}', space=vmem, size = 0x4000, scoped, tag = 'input window, operand 4, single buffered']
    #allocation9 [shape = 's32[1]{0}', space=sflag, size = 0x4, scoped, tag = 'scoped memory for tpu_custom_call.1']
    #allocation10 [shape = 'u8[2048]{0}', space=vmem, size = 0x800, scoped, tag = 'output window, operand 0, single buffered']
    %11 = vsyncpa [#allocation3], 0
    %12 = vsyncpa [#allocation6], 0
    %13 = vsyncpa [#allocation9], 0
    %14 = vsyncpa [#allocation4], 0
    // Predicated region
    $region2: #{tpu_custom_call.1} parent=1 // pred_check
      _
    $region3: #{tpu_custom_call.1} parent=1 // pred_check_branch
      %16 = sbr.rel (0) target = $region5
    $region4: #{tpu_custom_call.1} parent=1 // pred_region
      %s18 = ssub.s32 1024, 1024
      %19 = vsyncadd [#allocation3], %s18
      %s20 = sshll.u32 [#allocation2], 4
      %s21 = int_to_ptr.vmem [resolvable:$true] %s20
      %26 = dma.hbm_to_vmem [thread:$0]  %s0, 1024, %s21, [#allocation3], 128, 128, 8
    $region5: #{tpu_custom_call.1} parent=1 // pred_fallthru
      _
    // Predicated region
    $region6: #{tpu_custom_call.1} parent=1 // pred_check
      _
    $region7: #{tpu_custom_call.1} parent=1 // pred_check_branch
      %28 = sbr.rel (0) target = $region9
    $region8: #{tpu_custom_call.1} parent=1 // pred_region
      %s30 = ssub.s32 2048, 2048
      %31 = vsyncadd [#allocation6], %s30
      %s32 = sshll.u32 [#allocation5], 4
      %s33 = int_to_ptr.vmem [resolvable:$true] %s32
      %38 = dma.hbm_to_vmem [thread:$0]  %s1, 2048, %s33, [#allocation6], 128, 128, 8
    $region9: #{tpu_custom_call.1} parent=1 // pred_fallthru
      _
    // Predicated region
    $region10: #{tpu_custom_call.1} parent=1 // pred_check
      _
    $region11: #{tpu_custom_call.1} parent=1 // pred_check_branch
      %40 = sbr.rel (0) target = $region13
    $region12: #{tpu_custom_call.1} parent=1 // pred_region
      _
    $region13: #{tpu_custom_call.1} parent=1 // pred_fallthru
      _
    // Predicated region
    $region14: #{tpu_custom_call.1} parent=1 // pred_check
      _
    $region15: #{tpu_custom_call.1} parent=1 // pred_check_branch
      %42 = sbr.rel (0) target = $region17
    $region16: #{tpu_custom_call.1} parent=1 // pred_region
      %s44 = ssub.s32 512, 512
      %45 = vsyncadd [#allocation6], %s44
      %s46 = sshll.u32 [#allocation7], 4
      %s47 = int_to_ptr.vmem [resolvable:$true] %s46
      %52 = dma.hbm_to_vmem [thread:$0]  %s3, 512, %s47, [#allocation6], 128, 128, 8
    $region17: #{tpu_custom_call.1} parent=1 // pred_fallthru
      _
    // Predicated region
    $region18: #{tpu_custom_call.1} parent=1 // pred_check
      _
    $region19: #{tpu_custom_call.1} parent=1 // pred_check_branch
      %54 = sbr.rel (0) target = $region21
    $region20: #{tpu_custom_call.1} parent=1 // pred_region
      %s56 = ssub.s32 512, 512
      %57 = vsyncadd [#allocation9], %s56
      %s58 = sshll.u32 [#allocation8], 4
      %s59 = int_to_ptr.vmem [resolvable:$true] %s58
      %64 = dma.hbm_to_vmem [thread:$0]  %s4, 512, %s59, [#allocation9], 128, 128, 8
    $region21: #{tpu_custom_call.1} parent=1 // pred_fallthru
      _
    // Predicated region
    $region22: #{tpu_custom_call.1} parent=1 // pred_check
      _
    $region23: #{tpu_custom_call.1} parent=1 // pred_check_branch
      %66 = sbr.rel (0) target = $region25
    $region24: #{tpu_custom_call.1} parent=1 // pred_region
      _
    $region25: #{tpu_custom_call.1} parent=1 // pred_fallthru
      _
    // Predicated region
    $region26: #{tpu_custom_call.1} parent=1 // pred_check
      _
    $region27: #{tpu_custom_call.1} parent=1 // pred_check_branch
      %68 = sbr.rel (0) target = $region29
    $region28: #{tpu_custom_call.1} parent=1 // pred_region
      %69 = dma.done [#allocation3], 1024
    $region29: #{tpu_custom_call.1} parent=1 // pred_fallthru
      _
    // Predicated region
    $region30: #{tpu_custom_call.1} parent=1 // pred_check
      _
    $region31: #{tpu_custom_call.1} parent=1 // pred_check_branch
      %71 = sbr.rel (0) target = $region33
    $region32: #{tpu_custom_call.1} parent=1 // pred_region
      %72 = dma.done [#allocation6], 2048
    $region33: #{tpu_custom_call.1} parent=1 // pred_fallthru
      _
    // Predicated region
    $region34: #{tpu_custom_call.1} parent=1 // pred_check
      _
    $region35: #{tpu_custom_call.1} parent=1 // pred_check_branch
      %74 = sbr.rel (0) target = $region37
    $region36: #{tpu_custom_call.1} parent=1 // pred_region
      %75 = dma.done [#allocation6], 512
    $region37: #{tpu_custom_call.1} parent=1 // pred_fallthru
      _
    // Predicated region
    $region38: #{tpu_custom_call.1} parent=1 // pred_check
      _
    $region39: #{tpu_custom_call.1} parent=1 // pred_check_branch
      %77 = sbr.rel (0) target = $region41
    $region40: #{tpu_custom_call.1} parent=1 // pred_region
      %78 = dma.done [#allocation9], 512
    $region41: #{tpu_custom_call.1} parent=1 // pred_fallthru
      _
    %v79 = vld [vmem:[#allocation2] sm:$0xff]
    %v80 = vld [vmem:[#allocation2 + $0x8] sm:$0xff]
    %v81 = vld [vmem:[#allocation2 + $0x10] sm:$0xff]
    %v82 = vld [vmem:[#allocation2 + $0x18] sm:$0xff]
    %v83 = vld [vmem:[#allocation2 + $0x20] sm:$0xff]
    %v84 = vld [vmem:[#allocation2 + $0x28] sm:$0xff]
    %v85 = vld [vmem:[#allocation2 + $0x30] sm:$0xff]
    %v86 = vld [vmem:[#allocation2 + $0x38] sm:$0xff]
    %v87 = vld [vmem:[#allocation5] sm:$0xff]
    %v88 = vld [vmem:[#allocation5 + $0x8] sm:$0xff]
    %v89 = vld [vmem:[#allocation5 + $0x10] sm:$0xff]
    %v90 = vld [vmem:[#allocation5 + $0x18] sm:$0xff]
    %v91 = vld [vmem:[#allocation5 + $0x20] sm:$0xff]
    %v92 = vld [vmem:[#allocation5 + $0x28] sm:$0xff]
    %v93 = vld [vmem:[#allocation5 + $0x30] sm:$0xff]
    %v94 = vld [vmem:[#allocation5 + $0x38] sm:$0xff]
    %v95 = vld [vmem:[#allocation5 + $0x40] sm:$0xff]
    %v96 = vld [vmem:[#allocation5 + $0x48] sm:$0xff]
    %v97 = vld [vmem:[#allocation5 + $0x50] sm:$0xff]
    %v98 = vld [vmem:[#allocation5 + $0x58] sm:$0xff]
    %v99 = vld [vmem:[#allocation5 + $0x60] sm:$0xff]
    %v100 = vld [vmem:[#allocation5 + $0x68] sm:$0xff]
    %v101 = vld [vmem:[#allocation5 + $0x70] sm:$0xff]
    %v102 = vld [vmem:[#allocation5 + $0x78] sm:$0xff]
    %103 = vmatprep.subr.mxu0 0.0
    %104 = vmatpush1.msra.mxu0 %v87
    %105 = vmatprep.subr.mxu0 0.0
    %106 = vmatpush1.msra.mxu0 %v88
    %107 = vmatprep.subr.mxu0 0.0
    %108 = vmatpush1.msra.mxu0 %v89
    %109 = vmatprep.subr.mxu0 0.0
    %110 = vmatpush1.msra.mxu0 %v90
    %111 = vmatprep.subr.mxu0 0.0
    %112 = vmatpush1.msra.mxu0 %v91
    %113 = vmatprep.subr.mxu0 0.0
    %114 = vmatpush1.msra.mxu0 %v92
    %115 = vmatprep.subr.mxu0 0.0
    %116 = vmatpush1.msra.mxu0 %v93
    %117 = vmatprep.subr.mxu0 0.0
    %118 = vmatpush1.msra.mxu0 %v94
    %119 = vmatprep.subr.mxu0 0.0
    %120 = vmatpush1.msra.mxu0 %v95
    %121 = vmatprep.subr.mxu0 0.0
    %122 = vmatpush1.msra.mxu0 %v96
    %123 = vmatprep.subr.mxu0 0.0
    %124 = vmatpush1.msra.mxu0 %v97
    %125 = vmatprep.subr.mxu0 0.0
    %126 = vmatpush1.msra.mxu0 %v98
    %127 = vmatprep.subr.mxu0 0.0
    %128 = vmatpush1.msra.mxu0 %v99
    %129 = vmatprep.subr.mxu0 0.0
    %130 = vmatpush1.msra.mxu0 %v100
    %131 = vmatprep.subr.mxu0 0.0
    %132 = vmatpush1.msra.mxu0 %v101
    %133 = vmatprep.subr.mxu0 0.0
    %134 = vmatpush1.msra.mxu0 %v102
    %135 = vmatprep.subr.mxu0 0.0
    %136 = vmatpush1.msra.mxu0 0.0
    %137 = vmatprep.subr.mxu0 0.0
    %138 = vmatpush1.msra.mxu0 0.0
    %139 = vmatprep.subr.mxu0 0.0
    %140 = vmatpush1.msra.mxu0 0.0
    %141 = vmatprep.subr.mxu0 0.0
    %142 = vmatpush1.msra.mxu0 0.0
    %143 = vmatprep.subr.mxu0 0.0
    %144 = vmatpush1.msra.mxu0 0.0
    %145 = vmatprep.subr.mxu0 0.0
    %146 = vmatpush1.msra.mxu0 0.0
    %147 = vmatprep.subr.mxu0 0.0
    %148 = vmatpush1.msra.mxu0 0.0
    %149 = vmatprep.subr.mxu0 0.0
    %150 = vmatpush1.msra.mxu0 0.0
    %151 = vmatprep.subr.mxu0 0.0
    %152 = vmatpush1.msra.mxu0 0.0
    %153 = vmatprep.subr.mxu0 0.0
    %154 = vmatpush1.msra.mxu0 0.0
    %155 = vmatprep.subr.mxu0 0.0
    %156 = vmatpush1.msra.mxu0 0.0
    %157 = vmatprep.subr.mxu0 0.0
    %158 = vmatpush1.msra.mxu0 0.0
    %159 = vmatprep.subr.mxu0 0.0
    %160 = vmatpush1.msra.mxu0 0.0
    %161 = vmatprep.subr.mxu0 0.0
    %162 = vmatpush1.msra.mxu0 0.0
    %163 = vmatprep.subr.mxu0 0.0
    %164 = vmatpush1.msra.mxu0 0.0
    %165 = vmatprep.subr.mxu0 0.0
    %166 = vmatpush1.msra.mxu0 0.0
    %167 = vmatprep.mubr.f32.mxu0 0.0
    %168 = vmatmul.mubr.f32.gmra.mrb[0].mxu0 %v79
    %v169 = vpop.f32.mrb[0].mxu0
    %v170 = vadd.f32 0.0, %v169
    %v171 = vpop.f32.mrb[0].mxu0
    %172 = vmatprep.mubr.f32.mxu0 0.0
    %173 = vmatmul.mubr.f32.gmra.mrb[0].mxu0 %v80
    %v174 = vpop.f32.mrb[0].mxu0
    %v175 = vadd.f32 0.0, %v174
    %v176 = vpop.f32.mrb[0].mxu0
    %177 = vmatprep.mubr.f32.mxu0 0.0
    %178 = vmatmul.mubr.f32.gmra.mrb[0].mxu0 %v81
    %v179 = vpop.f32.mrb[0].mxu0
    %v180 = vadd.f32 0.0, %v179
    %v181 = vpop.f32.mrb[0].mxu0
    %182 = vmatprep.mubr.f32.mxu0 0.0
    %183 = vmatmul.mubr.f32.gmra.mrb[0].mxu0 %v82
    %v184 = vpop.f32.mrb[0].mxu0
    %v185 = vadd.f32 0.0, %v184
    %v186 = vpop.f32.mrb[0].mxu0
    %187 = vmatprep.mubr.f32.mxu0 0.0
    %188 = vmatmul.mubr.f32.gmra.mrb[0].mxu0 %v83
    %v189 = vpop.f32.mrb[0].mxu0
    %v190 = vadd.f32 0.0, %v189
    %v191 = vpop.f32.mrb[0].mxu0
    %192 = vmatprep.mubr.f32.mxu0 0.0
    %193 = vmatmul.mubr.f32.gmra.mrb[0].mxu0 %v84
    %v194 = vpop.f32.mrb[0].mxu0
    %v195 = vadd.f32 0.0, %v194
    %v196 = vpop.f32.mrb[0].mxu0
    %197 = vmatprep.mubr.f32.mxu0 0.0
    %198 = vmatmul.mubr.f32.gmra.mrb[0].mxu0 %v85
    %v199 = vpop.f32.mrb[0].mxu0
    %v200 = vadd.f32 0.0, %v199
    %v201 = vpop.f32.mrb[0].mxu0
    %202 = vmatprep.mubr.f32.mxu0 0.0
    %203 = vmatmul.mubr.f32.gmra.mrb[0].mxu0 %v86
    %v204 = vpop.f32.mrb[0].mxu0
    %v205 = vadd.f32 0.0, %v204
    %v206 = vpop.f32.mrb[0].mxu0
    %207 = vdwg.mxu0
    %v208 = vld [vmem:[%s2] sm:$0x1]
    %v210 = vlaneseq
    %v211 = vshrl.u32 %v210, 7
    %v212 = vsub.s32 0, %v211
    %v213 = vrot.slane %v208, %v212
    %v215 = vadd.f32 %v170, %v213
    %v216 = vadd.f32 %v175, %v213
    %v217 = vadd.f32 %v180, %v213
    %v218 = vadd.f32 %v185, %v213
    %v219 = vadd.f32 %v190, %v213
    %v220 = vadd.f32 %v195, %v213
    %v221 = vadd.f32 %v200, %v213
    %v222 = vadd.f32 %v205, %v213
    %v223 = vld [vmem:[#allocation7] sm:$0xff]
    %v224 = vld [vmem:[#allocation7 + $0x8] sm:$0xff]
    %v225 = vld [vmem:[#allocation7 + $0x10] sm:$0xff]
    %v226 = vld [vmem:[#allocation7 + $0x18] sm:$0xff]
    %v227 = vld [vmem:[#allocation8] sm:$0xff]
    %v228 = vld [vmem:[#allocation8 + $0x8] sm:$0xff]
    %v229 = vld [vmem:[#allocation8 + $0x10] sm:$0xff]
    %v230 = vld [vmem:[#allocation8 + $0x18] sm:$0xff]
    %v231 = vadd.f32 %v215, %v223
    %v232 = vadd.f32 %v216, %v224
    %v233 = vadd.f32 %v217, %v225
    %v234 = vadd.f32 %v218, %v226
    %v235 = vadd.f32 %v219, %v223
    %v236 = vadd.f32 %v220, %v224
    %v237 = vadd.f32 %v221, %v225
    %v238 = vadd.f32 %v222, %v226
    %v239 = vmax.f32 %v231, %v233
    %v240 = vmax.f32 %v232, %v234
    %v241 = vmax.f32 %v239, %v240
    %v242 = vrot.slane %v241, 4
    %v243 = vmax.f32 %v241, %v242
    %v244 = vrot.slane %v243, 2
    %v245 = vmax.f32 %v243, %v244
    %v246 = vrot.slane %v245, 1
    %v247 = vmax.f32 %v245, %v246
    %v248 = vmax.f32 %v235, %v237
    %v249 = vmax.f32 %v236, %v238
    %v250 = vmax.f32 %v248, %v249
    %v251 = vrot.slane %v250, 4
    %v252 = vmax.f32 %v250, %v251
    %v253 = vrot.slane %v252, 2
    %v254 = vmax.f32 %v252, %v253
    %v255 = vrot.slane %v254, 1
    %v256 = vmax.f32 %v254, %v255
    %vm257 = vcmp.gt.f32.partialorder %v215, 0.0
    %vm258 = vcmp.gt.f32.partialorder %v216, 0.0
    %vm259 = vcmp.gt.f32.partialorder %v217, 0.0
    %vm260 = vcmp.gt.f32.partialorder %v218, 0.0
    %vm261 = vcmp.gt.f32.partialorder %v219, 0.0
    %vm262 = vcmp.gt.f32.partialorder %v220, 0.0
    %vm263 = vcmp.gt.f32.partialorder %v221, 0.0
    %vm264 = vcmp.gt.f32.partialorder %v222, 0.0
    %v265 = vsel %vm257, %v227, 0.0
    %v266 = vsel %vm258, %v228, 0.0
    %v267 = vsel %vm259, %v229, 0.0
    %v268 = vsel %vm260, %v230, 0.0
    %v269 = vsel %vm261, %v227, 0.0
    %v270 = vsel %vm262, %v228, 0.0
    %v271 = vsel %vm263, %v229, 0.0
    %v272 = vsel %vm264, %v230, 0.0
    %v273 = vadd.f32 %v265, %v266
    %v274 = vadd.f32 %v273, %v267
    %v275 = vadd.f32 %v274, %v268
    %v276 = vrot.slane %v275, 4
    %v277 = vadd.f32 %v275, %v276
    %v278 = vrot.slane %v277, 2
    %v279 = vadd.f32 %v277, %v278
    %v280 = vrot.slane %v279, 1
    %v281 = vadd.f32 %v279, %v280
    %v282 = vadd.f32 %v269, %v270
    %v283 = vadd.f32 %v282, %v271
    %v284 = vadd.f32 %v283, %v272
    %v285 = vrot.slane %v284, 4
    %v286 = vadd.f32 %v284, %v285
    %v287 = vrot.slane %v286, 2
    %v288 = vadd.f32 %v286, %v287
    %v289 = vrot.slane %v288, 1
    %v290 = vadd.f32 %v288, %v289
    %v291 = vld [vmem:[%s5] sm:$0x1]
    %v293 = vlaneseq
    %v294 = vshrl.u32 %v293, 7
    %v295 = vsub.s32 0, %v294
    %v296 = vrot.slane %v291, %v295
    %v298 = vmul.f32 %v281, %v296
    %v299 = vmul.f32 %v290, %v296
    %300 = vst [vmem:[#allocation10] sm:$0x1] %v247
    %301 = vst [vmem:[#allocation10 + $0x2] sm:$0x1] %v256
    %302 = vst [vmem:[#allocation10 + $0x1] sm:$0x1] %v298
    %303 = vst [vmem:[#allocation10 + $0x3] sm:$0x1] %v299
    // Predicated region
    $region42: #{tpu_custom_call.1} parent=1 // pred_check
      _
    $region43: #{tpu_custom_call.1} parent=1 // pred_check_branch
      %305 = sbr.rel (0) target = $region45
    $region44: #{tpu_custom_call.1} parent=1 // pred_region
      %s307 = ssub.s32 64, 64
      %308 = vsyncadd [#allocation4], %s307
      %s309 = sshll.u32 [#allocation10], 4
      %s310 = int_to_ptr.vmem [resolvable:$true] %s309
      %315 = dma.vmem_to_hbm [thread:$0]  %s310, 64, %s6, [#allocation4], 32, 32, 2
    $region45: #{tpu_custom_call.1} parent=1 // pred_fallthru
      _
    // Predicated region
    $region46: #{tpu_custom_call.1} parent=1 // pred_check
      _
    $region47: #{tpu_custom_call.1} parent=1 // pred_check_branch
      %317 = sbr.rel (0) target = $region49
    $region48: #{tpu_custom_call.1} parent=1 // pred_region
      %318 = dma.done [#allocation4], 64
    $region49: #{tpu_custom_call.1} parent=1 // pred_fallthru
      _
    %319 = vsyncpa [#allocation3], 1
    %320 = vsyncpa [#allocation6], 1
    %321 = vsyncpa [#allocation9], 1
    %322 = vsyncpa [#allocation4], 1

</llo_original>
